<compile_context>
chip_gen: v7x
topology: tpu7x:2x2x1
jax: 0.10.0
libtpu: 0.0.40
codegen_flags: <defaults>
</compile_context>

<pallas_src>
import functools

import numpy as np
import jax
import jax.numpy as jnp
from jax.experimental import pallas as pl
from jax.experimental.pallas import tpu as pltpu


def _resample_face_tile_kernel(tile_face_ref, st_ref, tex_ref, out_ref, *, N, use_bf16):
    """One grid step = one tile of output pixels, all belonging to one face.

    tile_face_ref : (T,)        int32 SMEM scalar-prefetch table (used by index_maps only)
    st_ref        : (8, Tp)     f32 per-pixel statics: rows [u0, v0, 1-du, du, 1-dv, dv, 0, 0]
    tex_ref       : (BC, N, N)  this tile's face texture slab (all batch*channel rows)
    out_ref       : (BC, Tp)    lane-dense output tile
    """
    del tile_face_ref  # consumed by the index_maps, not the body
    BC = tex_ref.shape[0]
    Tp = st_ref.shape[1]

    # Host-precomputed bilinear statics (no clip/floor/du/dv math in the kernel).
    u0 = st_ref[0:1, :].astype(jnp.int32)   # (1, Tp) exact small integers
    v0 = st_ref[1:2, :].astype(jnp.int32)
    wu0 = st_ref[2:3, :]
    wu1 = st_ref[3:4, :]
    wv0 = st_ref[4:5, :]
    wv1 = st_ref[5:6, :]

    # Small separable factors (N, Tp): 2 nonzeros per column each.
    k = jax.lax.broadcasted_iota(jnp.int32, (N, Tp), 0)
    dku = k - u0
    wu = jnp.where(dku == 0, wu0, 0.0) + jnp.where(dku == 1, wu1, 0.0)   # (N, Tp)
    dkv = k - v0
    wv = jnp.where(dkv == 0, wv0, 0.0) + jnp.where(dkv == 1, wv1, 0.0)   # (N, Tp)

    # Stage 1: contract over u on the MXU.  (BC*N, N) view is a free leading-dim merge.
    lhs = tex_ref[...].reshape(BC * N, N)
    if use_bf16:
        # v6e/v7x: bf16 MXU, f32 accumulation (tolerance ~1e-2).
        t1 = jnp.dot(lhs.astype(jnp.bfloat16), wu.astype(jnp.bfloat16),
                     preferred_element_type=jnp.float32)                # (BC*N, Tp)
    else:
        t1 = jnp.dot(lhs.astype(jnp.float32), wu,
                     preferred_element_type=jnp.float32)                # (BC*N, Tp)

    # Stage 2: contract over v with an elementwise multiply + sublane reduction.
    t1 = t1.reshape(BC, N, Tp)
    out = jnp.sum(t1 * wv[None, :, :], axis=1)                          # (BC, Tp)
    out_ref[...] = out.astype(out_ref.dtype)


class ResampleFromUVTexturePallas:
    """Maps B x C x F x N x N tangent-image textures back to a B x C x H x W image.

    __init__ performs the host-side precompute (equivalent to register_buffer time):
    per-pixel bilinear statics, pixels grouped/sorted by face, each face's pixel list
    padded to a multiple of tile_pixels, and a per-tile face table for scalar prefetch.
    """

    def __init__(self, quad, uv, num_faces, num_samples, tile_pixels=None,
                 use_bf16_mxu=False):
        N = int(num_samples)
        assert N >= 8 and N % 8 == 0, "num_samples must be a multiple of 8 (sublane dim)"

        quad_host = np.asarray(quad)
        H, W = quad_host.shape
        HW = H * W

        # Clamp face ids like a real gather would.
        quad_flat = np.clip(quad_host.reshape(-1).astype(np.int32), 0, num_faces - 1)
        uv_flat = np.asarray(uv, dtype=np.float32).reshape(-1, 2)

        counts = np.bincount(quad_flat, minlength=num_faces)

        # Tile size: median face pixel count rounded up to 128, clamped to [128, 1024].
        if tile_pixels is None:
            nz = counts[counts > 0]
            med = int(np.median(nz)) if nz.size else 128
            Tp = int(np.clip(-(-med // 128) * 128, 128, 1024))
        else:
            Tp = int(tile_pixels)
        assert Tp % 128 == 0 and Tp >= 128, "tile_pixels must be a multiple of 128"

        # Per-pixel bilinear statics, computed once on the host.
        u = np.clip(uv_flat[:, 0], 0.0, N - 1.0)
        v = np.clip(uv_flat[:, 1], 0.0, N - 1.0)
        u0 = np.clip(np.floor(u), 0.0, N - 2.0)
        v0 = np.clip(np.floor(v), 0.0, N - 2.0)
        du = u - u0
        dv = v - v0
        stat = np.zeros((8, HW), np.float32)
        stat[0] = u0
        stat[1] = v0
        stat[2] = 1.0 - du
        stat[3] = du
        stat[4] = 1.0 - dv
        stat[5] = dv

        # Face-sorted, per-face padded layout.  Padded slots keep zero weights.
        order = np.argsort(quad_flat, kind="stable")
        tiles_per_face = (counts + Tp - 1) // Tp            # 0 tiles for empty faces
        T = int(tiles_per_face.sum())
        HWp = max(T, 1) * Tp

        stat_sorted = np.zeros((8, HWp), np.float32)
        pos_of_pixel = np.zeros(max(HW, 1), np.int32)
        tile_face = np.zeros(max(T, 1), np.int32)

        tile_i = 0
        src = 0
        for f in range(num_faces):
            c = int(counts[f])
            if c == 0:
                continue
            nt = int(tiles_per_face[f])
            dst0 = tile_i * Tp
            pix = order[src:src + c]
            stat_sorted[:, dst0:dst0 + c] = stat[:, pix]
            pos_of_pixel[pix] = dst0 + np.arange(c, dtype=np.int32)
            tile_face[tile_i:tile_i + nt] = f
            tile_i += nt
            src += c

        self.num_faces = int(num_faces)
        self.N = N
        self.H, self.W, self.HW, self.HWp = H, W, HW, HWp
        self.tile_pixels = Tp
        self.num_tiles = T
        self.use_bf16_mxu = bool(use_bf16_mxu)
        self.tile_face = jnp.asarray(tile_face)
        self.statics_sorted = jnp.asarray(stat_sorted)
        self.unsort_idx = jnp.asarray(pos_of_pixel[:HW])

    def __call__(self, x):
        B, C, F, N, N2 = x.shape
        assert N == N2 and F == self.num_faces and N == self.N
        BC = B * C
        Tp = self.tile_pixels

        if self.num_tiles == 0 or self.HW == 0:   # degenerate empty-image guard
            return jnp.zeros((B, C, self.H, self.W), x.dtype)

        # Pure reshape (contiguous) — no HBM transpose.  Face f occupies rows
        # [f*N, (f+1)*N) of the middle axis for every bc row.
        tex = x.reshape(BC, F * N, N)

        # Explicit VMEM budget (double-buffered blocks + in-kernel temporaries).
        lane = 128
        tex_block = BC * N * max(N, lane) * 4
        st_block = 8 * Tp * 4
        out_block = BC * Tp * 4
        temps = 2 * N * Tp * 4 + 2 * BC * N * Tp * 4 + tex_block
        est = 2 * (tex_block + st_block + out_block) + temps
        vmem_limit = int(min(max(2 * est, 32 << 20), 64 << 20))   # cap for v7x's 64 MiB

        kernel = functools.partial(_resample_face_tile_kernel, N=N,
                                   use_bf16=self.use_bf16_mxu)
        out_sorted = pl.pallas_call(
            kernel,
            out_shape=jax.ShapeDtypeStruct((BC, self.HWp), x.dtype),
            grid_spec=pltpu.PrefetchScalarGridSpec(
                num_scalar_prefetch=1,
                grid=(self.num_tiles,),
                in_specs=[
                    # full 8-sublane statics tile (8, Tp)
                    pl.BlockSpec((8, Tp), lambda t, tf: (0, t)),
                    # this tile's face slab (BC, N, N); face id read from SMEM prefetch.
                    # Pixels are face-sorted so consecutive tiles keep the same block
                    # index and Pallas skips the re-DMA (≈F slab fetches total).
                    pl.BlockSpec((BC, N, N), lambda t, tf: (0, tf[t], 0)),
                ],
                # lane-dense output tile (BC, Tp)
                out_specs=pl.BlockSpec((BC, Tp), lambda t, tf: (0, t)),
            ),
            compiler_params=pltpu.CompilerParams(
                dimension_semantics=("parallel",),   # shards tiles across v7x's 2 TCs
                vmem_limit_bytes=vmem_limit),
        )(self.tile_face, self.statics_sorted, tex)

        # Undo the face sort (padded slots are simply never gathered).
        out = jnp.take(out_sorted, self.unsort_idx, axis=1)      # (BC, HW)
        return out.reshape(B, C, self.H, self.W)


def _reference(x, quad, uv):
    """Pure-JAX reference of the same bilinear face-texture resampling."""
    B, C, F, N, _ = x.shape
    H, W = quad.shape
    tex = x.reshape(B, C, F * N * N)
    f = jnp.clip(quad.reshape(-1).astype(jnp.int32), 0, F - 1)
    u = jnp.clip(uv[..., 0].reshape(-1), 0.0, N - 1.0)
    v = jnp.clip(uv[..., 1].reshape(-1), 0.0, N - 1.0)
    u0f = jnp.clip(jnp.floor(u), 0.0, N - 2.0)
    v0f = jnp.clip(jnp.floor(v), 0.0, N - 2.0)
    du, dv = u - u0f, v - v0f
    u0, v0 = u0f.astype(jnp.int32), v0f.astype(jnp.int32)
    base = f * N * N + v0 * N + u0

    def g(idx):
        return tex[:, :, idx]                                      # (B, C, HW)

    out = ((1 - du) * (1 - dv) * g(base)
           + du * (1 - dv) * g(base + 1)
           + (1 - du) * dv * g(base + N)
           + du * dv * g(base + N + 1))
    return out.reshape(B, C, H, W)


if __name__ == "__main__":
    # Small shapes consistent with the module:
    #   base_order=0 icosphere -> F = 20 faces
    #   sample_order=4         -> N = 2**(4-0) = 16 texels per side
    #   image_shape = (16, 32) equirectangular output
    B, C, F, N = 2, 4, 20, 16
    H, W = 16, 32

    key = jax.random.PRNGKey(0)
    kx, kq, ku = jax.random.split(key, 3)
    x = jax.random.normal(kx, (B, C, F, N, N), dtype=jnp.float32)
    quad = jax.random.randint(kq, (H, W), 0, F, dtype=jnp.int32)
    uv = jax.random.uniform(ku, (H, W, 2), dtype=jnp.float32,
                            minval=0.0, maxval=float(N - 1))

    ref = jax.block_until_ready(_reference(x, quad, uv))

    # f32 MXU path (default): tight tolerance.
    layer = ResampleFromUVTexturePallas(quad, uv, num_faces=F, num_samples=N)
    out = jax.block_until_ready(layer(x))
    assert out.shape == (B, C, H, W)
    assert jnp.allclose(out, ref, atol=1e-5, rtol=1e-5), "f32 mismatch vs reference"

    # bf16 MXU path (v6e/v7x optimization): f32 accumulation, looser tolerance.
    layer_bf16 = ResampleFromUVTexturePallas(quad, uv, num_faces=F, num_samples=N,
                                             use_bf16_mxu=True)
    out_bf16 = jax.block_until_ready(layer_bf16(x))
    assert jnp.allclose(out_bf16, ref, atol=1e-1, rtol=1e-1), "bf16 mismatch vs reference"

    print("KERNEL_OK")
</pallas_src>

<mosaic_0001>
module attributes {stable_mosaic.version = 11 : i64} {
  func.func @_resample_face_tile_kernel(%arg0: i32, %arg1: memref<20xi32, #tpu.memory_space<smem>>, %arg2: memref<8x128xf32, #tpu.memory_space<vmem>>, %arg3: memref<8x16x16xf32, #tpu.memory_space<vmem>>, %arg4: memref<8x128xf32, #tpu.memory_space<vmem>>) attributes {dimension_semantics = [#tpu.dimension_semantics<parallel>], iteration_bounds = array<i64: 20>, scalar_prefetch = 1 : i64, scratch_operands = 0 : i64, tpu.core_type = #tpu.core_type<tc>, window_params = [{transform_indices = @transform_0, window_bounds = array<i64: 8, 128>}, {transform_indices = @transform_1, window_bounds = array<i64: 8, 16, 16>}, {transform_indices = @transform_2, window_bounds = array<i64: 8, 128>}]} {
    %c0 = arith.constant 0 : index
    %c0_0 = arith.constant 0 : index
    %0 = vector.load %arg2[%c0, %c0_0] : memref<8x128xf32, #tpu.memory_space<vmem>>, vector<1x128xf32>
    %1 = arith.fptosi %0 : vector<1x128xf32> to vector<1x128xi32>
    %c1 = arith.constant 1 : index
    %c0_1 = arith.constant 0 : index
    %2 = vector.load %arg2[%c1, %c0_1] : memref<8x128xf32, #tpu.memory_space<vmem>>, vector<1x128xf32>
    %3 = arith.fptosi %2 : vector<1x128xf32> to vector<1x128xi32>
    %c2 = arith.constant 2 : index
    %c0_2 = arith.constant 0 : index
    %4 = vector.load %arg2[%c2, %c0_2] : memref<8x128xf32, #tpu.memory_space<vmem>>, vector<1x128xf32>
    %c3 = arith.constant 3 : index
    %c0_3 = arith.constant 0 : index
    %5 = vector.load %arg2[%c3, %c0_3] : memref<8x128xf32, #tpu.memory_space<vmem>>, vector<1x128xf32>
    %c4 = arith.constant 4 : index
    %c0_4 = arith.constant 0 : index
    %6 = vector.load %arg2[%c4, %c0_4] : memref<8x128xf32, #tpu.memory_space<vmem>>, vector<1x128xf32>
    %c5 = arith.constant 5 : index
    %c0_5 = arith.constant 0 : index
    %7 = vector.load %arg2[%c5, %c0_5] : memref<8x128xf32, #tpu.memory_space<vmem>>, vector<1x128xf32>
    %8 = tpu.iota {dimensions = array<i32: 0>} : vector<16x128xi32>
    %9 = vector.broadcast %1 : vector<1x128xi32> to vector<16x128xi32>
    %10 = arith.subi %8, %9 : vector<16x128xi32>
    %c0_i32 = arith.constant 0 : i32
    %11 = vector.broadcast %c0_i32 : i32 to vector<16x128xi32>
    %12 = arith.cmpi eq, %10, %11 : vector<16x128xi32>
    %cst = arith.constant 0.000000e+00 : f32
    %13 = vector.shape_cast %4 : vector<1x128xf32> to vector<1x128xf32>
    %14 = vector.broadcast %13 : vector<1x128xf32> to vector<16x128xf32>
    %15 = vector.broadcast %cst : f32 to vector<16x128xf32>
    %16 = arith.select %12, %14, %15 : vector<16x128xi1>, vector<16x128xf32>
    %c1_i32 = arith.constant 1 : i32
    %17 = vector.broadcast %c1_i32 : i32 to vector<16x128xi32>
    %18 = arith.cmpi eq, %10, %17 : vector<16x128xi32>
    %cst_6 = arith.constant 0.000000e+00 : f32
    %19 = vector.shape_cast %5 : vector<1x128xf32> to vector<1x128xf32>
    %20 = vector.broadcast %19 : vector<1x128xf32> to vector<16x128xf32>
    %21 = vector.broadcast %cst_6 : f32 to vector<16x128xf32>
    %22 = arith.select %18, %20, %21 : vector<16x128xi1>, vector<16x128xf32>
    %23 = arith.addf %16, %22 : vector<16x128xf32>
    %24 = vector.broadcast %3 : vector<1x128xi32> to vector<16x128xi32>
    %25 = arith.subi %8, %24 : vector<16x128xi32>
    %c0_i32_7 = arith.constant 0 : i32
    %26 = vector.broadcast %c0_i32_7 : i32 to vector<16x128xi32>
    %27 = arith.cmpi eq, %25, %26 : vector<16x128xi32>
    %cst_8 = arith.constant 0.000000e+00 : f32
    %28 = vector.shape_cast %6 : vector<1x128xf32> to vector<1x128xf32>
    %29 = vector.broadcast %28 : vector<1x128xf32> to vector<16x128xf32>
    %30 = vector.broadcast %cst_8 : f32 to vector<16x128xf32>
    %31 = arith.select %27, %29, %30 : vector<16x128xi1>, vector<16x128xf32>
    %c1_i32_9 = arith.constant 1 : i32
    %32 = vector.broadcast %c1_i32_9 : i32 to vector<16x128xi32>
    %33 = arith.cmpi eq, %25, %32 : vector<16x128xi32>
    %cst_10 = arith.constant 0.000000e+00 : f32
    %34 = vector.shape_cast %7 : vector<1x128xf32> to vector<1x128xf32>
    %35 = vector.broadcast %34 : vector<1x128xf32> to vector<16x128xf32>
    %36 = vector.broadcast %cst_10 : f32 to vector<16x128xf32>
    %37 = arith.select %33, %35, %36 : vector<16x128xi1>, vector<16x128xf32>
    %38 = arith.addf %31, %37 : vector<16x128xf32>
    %c0_11 = arith.constant 0 : index
    %c0_12 = arith.constant 0 : index
    %c0_13 = arith.constant 0 : index
    %39 = vector.load %arg3[%c0_11, %c0_12, %c0_13] : memref<8x16x16xf32, #tpu.memory_space<vmem>>, vector<8x16x16xf32>
    %40 = vector.shape_cast %39 : vector<8x16x16xf32> to vector<128x16xf32>
    %cst_14 = arith.constant dense<0.000000e+00> : vector<128x128xf32>
    %41 = tpu.matmul %40, %23, %cst_14 {dimension_numbers = #tpu.dot_dimension_numbers<[1], [0], [0], [1], [0, 0, 1, 1], [], []>} : vector<128x16xf32>, vector<16x128xf32>, vector<128x128xf32> -> vector<128x128xf32>
    %42 = vector.shape_cast %41 : vector<128x128xf32> to vector<8x16x128xf32>
    %43 = vector.shape_cast %38 : vector<16x128xf32> to vector<1x16x128xf32>
    %44 = vector.broadcast %43 : vector<1x16x128xf32> to vector<8x16x128xf32>
    %45 = arith.mulf %42, %44 : vector<8x16x128xf32>
    %cst_15 = arith.constant dense<0.000000e+00> : vector<8x128xf32>
    %46 = vector.multi_reduction <add>, %45, %cst_15 [1] : vector<8x16x128xf32> to vector<8x128xf32>
    %c0_16 = arith.constant 0 : index
    %c0_17 = arith.constant 0 : index
    %47 = vector.load %arg4[%c0_16, %c0_17] : memref<8x128xf32, #tpu.memory_space<vmem>>, vector<8x128xf32>
    tpu.vector_store %arg4[%c0_16, %c0_17], %46 {strides = array<i32>} : memref<8x128xf32, #tpu.memory_space<vmem>>, vector<8x128xf32>,
    return
  }
  func.func @transform_0(%arg0: i32, %arg1: memref<20xi32, #tpu.memory_space<smem>>) -> (i32, i32) {
    %c0_i32 = arith.constant 0 : i32
    %c0_i32_0 = arith.constant 0 : i32
    return %c0_i32, %arg0 : i32, i32
  }
  func.func @transform_1(%arg0: i32, %arg1: memref<20xi32, #tpu.memory_space<smem>>) -> (i32, i32, i32) {
    %0 = arith.index_cast %arg0 : i32 to index
    %1 = memref.load %arg1[%0] : memref<20xi32, #tpu.memory_space<smem>>
    %c0_i32 = arith.constant 0 : i32
    %c0_i32_0 = arith.constant 0 : i32
    %c0_i32_1 = arith.constant 0 : i32
    return %c0_i32, %1, %c0_i32_0 : i32, i32, i32
  }
  func.func @transform_2(%arg0: i32, %arg1: memref<20xi32, #tpu.memory_space<smem>>) -> (i32, i32) {
    %c0_i32 = arith.constant 0 : i32
    %c0_i32_0 = arith.constant 0 : i32
    return %c0_i32, %arg0 : i32, i32
  }
}

</mosaic_0001>

<llo_original>
// kernel: tpu_custom_call.1
$region0: #{tpu_custom_call.1}
  #allocation0 [shape = 'u32[]', space=smem, size = 0x4, offset = 0x4, fixed_abs, tag = 'smem constant byte address 0x4 - core index']
  #allocation1 [shape = 'u32[144,128]{1,0:T(1,128)}', space=vmem, size = 0x12000, scoped, tag = 'internal scratch']
  #allocation2 [shape = 's32[1]{0}', space=sflag, size = 0x4, scoped, tag = 'scoped memory for tpu_custom_call.1']
  #allocation3 [shape = 'u8[512]{0}', space=smem, size = 0x200, scoped, tag = 'prefetched SMEM operand 0']
  %s0 = inlined_call_operand.vmem [shape: s32[20], index: 0, kind: input, shape index: {}]
  %s1 = inlined_call_operand.vmem [shape: f32[8,2560], index: 1, kind: input, shape index: {}]
  %s2 = inlined_call_operand.vmem [shape: f32[8,320,16], index: 2, kind: input, shape index: {}]
  %s3 = inlined_call_operand.hbm [shape: f32[8,2560], index: 3, kind: output, shape index: {}]
  %s4 = sld [smem:[#allocation0]]
  $region79: #{tpu_custom_call.1} parent=0
    _
  %s6 = ssub.s32 1, %s4
  %s7 = scalar_select 0, %s6, %s4
  %s8 = sshll.u32 %s0, 4
  %s9 = int_to_ptr.vmem [resolvable:$true] %s8
  %11 = dma.vmem_to_smem %s9, 16, [#allocation3], [#allocation2]
  %12 = dma.done [#allocation2], 16
  %13 = sfence
  $region1: #{tpu_custom_call.1} parent=0
    #allocation4 [shape = 'u8[131072]{0}', space=vmem, size = 0x20000, scoped, tag = 'input window, operand 2']
    #allocation5 [shape = 'u8[8192]{0}', space=vmem, size = 0x2000, scoped, tag = 'output window, operand 0']
    #allocation6 [shape = 's32[2]{0}', space=sflag, size = 0x8, scoped, tag = 'scoped memory for tpu_custom_call.1']
    %14 = vsyncpa [#allocation6], 0
    %s15 = scalar_lea.sflag [#allocation6], 1
    %16 = vsyncpa %s15, 0
    loop: start=0, step=1, limit=22
    $region2: #{tpu_custom_call.1} parent=1 // loop_pre_header
      _
    $region3: #{tpu_custom_call.1} parent=1 // loop_header
      %s18 = sphi 0, %s22
      %p19 = scmp.ge.s32.totalorder %s18, 22
      %s28 = sphi 0, %s30
      %s31 = sphi 0, %s28
      %s32 = sphi 0, %s31
      %s48 = sphi 0, %s32
      %s56 = sphi 0, %s58
      %s59 = sphi 0, %s56
      %s60 = sphi 0, %s59
      %s76 = sphi 0, %s60
      %s82 = sphi 0, %s84
      %s85 = sphi 0, %s82
      %s86 = sphi 0, %s85
      %s102 = sphi 0, %s86
    $region4: #{tpu_custom_call.1} parent=1 // loop_header_branch
      %21 = sbr.rel (%p19) target = $region8
    $region5: #{tpu_custom_call.1} parent=1 // loop_body
      %s23 = ssub.s32 %s18, 1
      %s24 = ssub.s32 %s18, 2
      %s25 = sadd.s32 %s18, 1
      %s26 = ssub.s32 %s18, %s25
      %p27 = scmp.eq.s32.totalorder %s26, 0
      %s29 = sadd.s32 %s28, 1
      %s30 = scalar_select %p27, %s28, %s29
      %p33 = pneg %p27
      %p34 = scmp.eq.s32.totalorder %s18, 19
      %p35 = por %p33, %p34
      %p36 = scmp.ne.s32.totalorder %s28, %s31
      %p37 = scmp.eq.s32.totalorder %s18, 0
      %p38 = por %p36, %p37
      %p39 = scmp.ne.s32.totalorder %s28, %s31
      %p40 = scmp.eq.s32.totalorder %s23, 19
      %p41 = por %p39, %p40
      %p42 = scmp.ne.s32.totalorder %s31, %s32
      %p43 = scmp.eq.s32.totalorder %s23, 0
      %p44 = por %p42, %p43
      %p45 = scmp.ne.s32.totalorder %s31, %s32
      %p46 = scmp.eq.s32.totalorder %s24, 19
      %p47 = por %p45, %p46
      %p49 = scmp.ne.s32.totalorder %s32, %s48
      %p50 = scmp.eq.s32.totalorder %s24, 0
      %p51 = por %p49, %p50
      %s52 = sld [smem:[#allocation3 + %s18]]
      %s53 = sld [smem:[#allocation3 + %s25]]
      %s54 = ssub.s32 %s52, %s53
      %p55 = scmp.eq.s32.totalorder %s54, 0
      %s57 = sadd.s32 %s56, 1
      %s58 = scalar_select %p55, %s56, %s57
      %p61 = pneg %p55
      %p62 = scmp.eq.s32.totalorder %s18, 19
      %p63 = por %p61, %p62
      %p64 = scmp.ne.s32.totalorder %s56, %s59
      %p65 = scmp.eq.s32.totalorder %s18, 0
      %p66 = por %p64, %p65
      %p67 = scmp.ne.s32.totalorder %s56, %s59
      %p68 = scmp.eq.s32.totalorder %s23, 19
      %p69 = por %p67, %p68
      %p70 = scmp.ne.s32.totalorder %s59, %s60
      %p71 = scmp.eq.s32.totalorder %s23, 0
      %p72 = por %p70, %p71
      %p73 = scmp.ne.s32.totalorder %s59, %s60
      %p74 = scmp.eq.s32.totalorder %s24, 19
      %p75 = por %p73, %p74
      %p77 = scmp.ne.s32.totalorder %s60, %s76
      %p78 = scmp.eq.s32.totalorder %s24, 0
      %p79 = por %p77, %p78
      %s80 = ssub.s32 %s18, %s25
      %p81 = scmp.eq.s32.totalorder %s80, 0
      %s83 = sadd.s32 %s82, 1
      %s84 = scalar_select %p81, %s82, %s83
      %p87 = pneg %p81
      %p88 = scmp.eq.s32.totalorder %s18, 19
      %p89 = por %p87, %p88
      %p90 = scmp.ne.s32.totalorder %s82, %s85
      %p91 = scmp.eq.s32.totalorder %s18, 0
      %p92 = por %p90, %p91
      %p93 = scmp.ne.s32.totalorder %s82, %s85
      %p94 = scmp.eq.s32.totalorder %s23, 19
      %p95 = por %p93, %p94
      %p96 = scmp.ne.s32.totalorder %s85, %s86
      %p97 = scmp.eq.s32.totalorder %s23, 0
      %p98 = por %p96, %p97
      %p99 = scmp.ne.s32.totalorder %s85, %s86
      %p100 = scmp.eq.s32.totalorder %s24, 19
      %p101 = por %p99, %p100
      %p103 = scmp.ne.s32.totalorder %s86, %s102
      %p104 = scmp.eq.s32.totalorder %s24, 0
      %p105 = por %p103, %p104
      %p106 = scmp.le.s32.totalorder 1, %s18
      %p107 = scmp.lt.s32.totalorder %s18, 21
      %p108 = pnand %p106, %p107
      %p109 = pneg %p108
      // Predicated region
      $region9: #{tpu_custom_call.1} parent=5 // pred_check
        _
      $region10: #{tpu_custom_call.1} parent=5 // pred_check_branch
        %111 = sbr.rel (%p108) target = $region12
      $region11: #{tpu_custom_call.1} parent=5 // pred_region
        %s112 = ssub.s32 %s18, 1
      $region12: #{tpu_custom_call.1} parent=5 // pred_fallthru
        _
      %p113 = scmp.lt.s32.totalorder %s18, 20
      // Predicated region
      $region13: #{tpu_custom_call.1} parent=5 // pred_check
        %p114 = pneg %p113
      $region14: #{tpu_custom_call.1} parent=5 // pred_check_branch
        %116 = sbr.rel (%p114) target = $region16
      $region15: #{tpu_custom_call.1} parent=5 // pred_region
        // Predicated region
        $region17: #{tpu_custom_call.1} parent=15 // pred_check
          %p117 = pneg %p38
        $region18: #{tpu_custom_call.1} parent=15 // pred_check_branch
          %119 = sbr.rel (%p117) target = $region20
        $region19: #{tpu_custom_call.1} parent=15 // pred_region
          %p120 = scmp.lt.s32.totalorder %s18, 19
          %s121 = scalar_select %p120, %s18, 19
          %s122 = smul.addr %s121, 8
          %s123 = scalar_lea.vmem %s1, %s122
        $region20: #{tpu_custom_call.1} parent=15 // pred_fallthru
          _
        // Predicated region
        $region21: #{tpu_custom_call.1} parent=15 // pred_check
          %p124 = pneg %p66
        $region22: #{tpu_custom_call.1} parent=15 // pred_check_branch
          %126 = sbr.rel (%p124) target = $region24
        $region23: #{tpu_custom_call.1} parent=15 // pred_region
          %s127 = sand.u32 %s56, 1
          %s128 = sand.u32 %s56, 1
          %s129 = smul.addr %s128, 128
          %s130 = scalar_lea.vmem [#allocation4], %s129
          %s131 = sld [smem:[#allocation3 + %s18]]
          %s132 = smul.u32 2, %s131
          %s133 = smul.addr %s132, 8
          %s134 = scalar_lea.vmem %s2, %s133
          // Predicated region
          $region25: #{tpu_custom_call.1} parent=23 // pred_check
            _
          $region26: #{tpu_custom_call.1} parent=23 // pred_check_branch
            %136 = sbr.rel (0) target = $region28
          $region27: #{tpu_custom_call.1} parent=23 // pred_region
            // Predicated region
            $region29: #{tpu_custom_call.1} parent=27 // pred_check
              _
            $region30: #{tpu_custom_call.1} parent=27 // pred_check_branch
              %138 = sbr.rel (0) target = $region32
            $region31: #{tpu_custom_call.1} parent=27 // pred_region
              // Predicated region
              $region44: #{tpu_custom_call.1} parent=31 // pred_check
                _
              $region45: #{tpu_custom_call.1} parent=31 // pred_check_branch
                %183 = sbr.rel (0) target = $region47
              $region46: #{tpu_custom_call.1} parent=31 // pred_region
                loop: start=0, step=1, limit=1
                $region48: #{tpu_custom_call.1} parent=46 // loop_pre_header
                  _
                $region49: #{tpu_custom_call.1} parent=46 // loop_header
                  %s185 = sphi 0, %s189
                  %p186 = scmp.ge.s32.totalorder %s185, 1
                  %s190 = sphi %s134, %s134
                  %s191 = sphi %s130, %s130
                $region50: #{tpu_custom_call.1} parent=46 // loop_header_branch
                  %188 = sbr.rel (%p186) target = $region54
                $region51: #{tpu_custom_call.1} parent=46 // loop_body
                  %v192 = vld [vmem:[%s190] sm:$0xff]
                  %193 = vst [vmem:[%s191] sm:$0xff] %v192
                  %v194 = vld [vmem:[%s190 + $0x8] sm:$0xff]
                  %195 = vst [vmem:[%s191 + $0x8] sm:$0xff] %v194
                  %v196 = vld [vmem:[%s190 + $0x140] sm:$0xff]
                  %197 = vst [vmem:[%s191 + $0x10] sm:$0xff] %v196
                  %v198 = vld [vmem:[%s190 + $0x148] sm:$0xff]
                  %199 = vst [vmem:[%s191 + $0x18] sm:$0xff] %v198
                  %v200 = vld [vmem:[%s190 + $0x280] sm:$0xff]
                  %201 = vst [vmem:[%s191 + $0x20] sm:$0xff] %v200
                  %v202 = vld [vmem:[%s190 + $0x288] sm:$0xff]
                  %203 = vst [vmem:[%s191 + $0x28] sm:$0xff] %v202
                  %v204 = vld [vmem:[%s190 + $0x3c0] sm:$0xff]
                  %205 = vst [vmem:[%s191 + $0x30] sm:$0xff] %v204
                  %v206 = vld [vmem:[%s190 + $0x3c8] sm:$0xff]
                  %207 = vst [vmem:[%s191 + $0x38] sm:$0xff] %v206
                  %v208 = vld [vmem:[%s190 + $0x500] sm:$0xff]
                  %209 = vst [vmem:[%s191 + $0x40] sm:$0xff] %v208
                  %v210 = vld [vmem:[%s190 + $0x508] sm:$0xff]
                  %211 = vst [vmem:[%s191 + $0x48] sm:$0xff] %v210
                  %v212 = vld [vmem:[%s190 + $0x640] sm:$0xff]
                  %213 = vst [vmem:[%s191 + $0x50] sm:$0xff] %v212
                  %v214 = vld [vmem:[%s190 + $0x648] sm:$0xff]
                  %215 = vst [vmem:[%s191 + $0x58] sm:$0xff] %v214
                  %v216 = vld [vmem:[%s190 + $0x780] sm:$0xff]
                  %217 = vst [vmem:[%s191 + $0x60] sm:$0xff] %v216
                  %v218 = vld [vmem:[%s190 + $0x788] sm:$0xff]
                  %219 = vst [vmem:[%s191 + $0x68] sm:$0xff] %v218
                  %v220 = vld [vmem:[%s190 + $0x8c0] sm:$0xff]
                  %221 = vst [vmem:[%s191 + $0x70] sm:$0xff] %v220
                  %v222 = vld [vmem:[%s190 + $0x8c8] sm:$0xff]
                  %223 = vst [vmem:[%s191 + $0x78] sm:$0xff] %v222
                $region52: #{tpu_custom_call.1} parent=46 // loop_footer
                  %s189 = sadd.s32 1, %s185
                $region53: #{tpu_custom_call.1} parent=46 // loop_footer_branch
                  %184 = sbr.rel target = $region49
                $region54: #{tpu_custom_call.1} parent=46 // loop_exit
                  _
              $region47: #{tpu_custom_call.1} parent=31 // pred_fallthru
                _
              // Predicated region
              $region55: #{tpu_custom_call.1} parent=31 // pred_check
                _
              $region56: #{tpu_custom_call.1} parent=31 // pred_check_branch
                %225 = sbr.rel target = $region58
              $region57: #{tpu_custom_call.1} parent=31 // pred_region
                _
              $region58: #{tpu_custom_call.1} parent=31 // pred_fallthru
                _
            $region32: #{tpu_custom_call.1} parent=27 // pred_fallthru
              _
            // Predicated region
            $region33: #{tpu_custom_call.1} parent=27 // pred_check
              _
            $region34: #{tpu_custom_call.1} parent=27 // pred_check_branch
              %140 = sbr.rel target = $region36
            $region35: #{tpu_custom_call.1} parent=27 // pred_region
              loop: start=0, step=1, limit=1
              $region37: #{tpu_custom_call.1} parent=35 // loop_pre_header
                _
              $region38: #{tpu_custom_call.1} parent=35 // loop_header
                %s143 = sphi 0, %s147
                %p144 = scmp.ge.s32.totalorder %s143, 1
                %s148 = sphi %s134, %s134
                %s149 = sphi %s130, %s130
              $region39: #{tpu_custom_call.1} parent=35 // loop_header_branch
                %146 = sbr.rel (%p144) target = $region43
              $region40: #{tpu_custom_call.1} parent=35 // loop_body
                %v150 = vld [vmem:[%s148] sm:$0xff]
                %151 = vst [vmem:[%s149] sm:$0xff] %v150
                %v152 = vld [vmem:[%s148 + $0x8] sm:$0xff]
                %153 = vst [vmem:[%s149 + $0x8] sm:$0xff] %v152
                %v154 = vld [vmem:[%s148 + $0x140] sm:$0xff]
                %155 = vst [vmem:[%s149 + $0x10] sm:$0xff] %v154
                %v156 = vld [vmem:[%s148 + $0x148] sm:$0xff]
                %157 = vst [vmem:[%s149 + $0x18] sm:$0xff] %v156
                %v158 = vld [vmem:[%s148 + $0x280] sm:$0xff]
                %159 = vst [vmem:[%s149 + $0x20] sm:$0xff] %v158
                %v160 = vld [vmem:[%s148 + $0x288] sm:$0xff]
                %161 = vst [vmem:[%s149 + $0x28] sm:$0xff] %v160
                %v162 = vld [vmem:[%s148 + $0x3c0] sm:$0xff]
                %163 = vst [vmem:[%s149 + $0x30] sm:$0xff] %v162
                %v164 = vld [vmem:[%s148 + $0x3c8] sm:$0xff]
                %165 = vst [vmem:[%s149 + $0x38] sm:$0xff] %v164
                %v166 = vld [vmem:[%s148 + $0x500] sm:$0xff]
                %167 = vst [vmem:[%s149 + $0x40] sm:$0xff] %v166
                %v168 = vld [vmem:[%s148 + $0x508] sm:$0xff]
                %169 = vst [vmem:[%s149 + $0x48] sm:$0xff] %v168
                %v170 = vld [vmem:[%s148 + $0x640] sm:$0xff]
                %171 = vst [vmem:[%s149 + $0x50] sm:$0xff] %v170
                %v172 = vld [vmem:[%s148 + $0x648] sm:$0xff]
                %173 = vst [vmem:[%s149 + $0x58] sm:$0xff] %v172
                %v174 = vld [vmem:[%s148 + $0x780] sm:$0xff]
                %175 = vst [vmem:[%s149 + $0x60] sm:$0xff] %v174
                %v176 = vld [vmem:[%s148 + $0x788] sm:$0xff]
                %177 = vst [vmem:[%s149 + $0x68] sm:$0xff] %v176
                %v178 = vld [vmem:[%s148 + $0x8c0] sm:$0xff]
                %179 = vst [vmem:[%s149 + $0x70] sm:$0xff] %v178
                %v180 = vld [vmem:[%s148 + $0x8c8] sm:$0xff]
                %181 = vst [vmem:[%s149 + $0x78] sm:$0xff] %v180
              $region41: #{tpu_custom_call.1} parent=35 // loop_footer
                %s147 = sadd.s32 1, %s143
              $region42: #{tpu_custom_call.1} parent=35 // loop_footer_branch
                %142 = sbr.rel target = $region38
              $region43: #{tpu_custom_call.1} parent=35 // loop_exit
                _
            $region36: #{tpu_custom_call.1} parent=27 // pred_fallthru
              _
          $region28: #{tpu_custom_call.1} parent=23 // pred_fallthru
            _
          %226 = vnop
        $region24: #{tpu_custom_call.1} parent=15 // pred_fallthru
          _
      $region16: #{tpu_custom_call.1} parent=5 // pred_fallthru
        _
      %p227 = scmp.le.s32.totalorder 1, %s18
      %p228 = scmp.lt.s32.totalorder %s18, 21
      %p229 = pnand %p227, %p228
      %p230 = pneg %p229
      // Predicated region
      $region59: #{tpu_custom_call.1} parent=5 // pred_check
        _
      $region60: #{tpu_custom_call.1} parent=5 // pred_check_branch
        %232 = sbr.rel (%p229) target = $region62
      $region61: #{tpu_custom_call.1} parent=5 // pred_region
        %s233 = ssub.s32 %s18, 1
        %s234 = sand.u32 %s59, 1
        %s235 = sand.u32 %s59, 1
        %s236 = smul.addr %s235, 128
        %s237 = scalar_lea.vmem [#allocation4], %s236
        // Predicated region
        $region63: #{tpu_custom_call.1} parent=61 // pred_check
          %p238 = pneg %p72
        $region64: #{tpu_custom_call.1} parent=61 // pred_check_branch
          %240 = sbr.rel (%p238) target = $region66
        $region65: #{tpu_custom_call.1} parent=61 // pred_region
          _
        $region66: #{tpu_custom_call.1} parent=61 // pred_fallthru
          _
        %p241 = scmp.lt.s32.totalorder %s23, 19
        %s242 = scalar_select %p241, %s23, 19
        %s243 = smul.addr %s242, 8
        %s244 = scalar_lea.vmem %s1, %s243
        %p245 = pneg %p44
        %p246 = pneg %p41
        %s247 = sand.u32 %s59, 1
        %s248 = sand.u32 %s59, 1
        %s249 = smul.addr %s248, 128
        %s250 = scalar_lea.vmem [#allocation4], %s249
        %p251 = pneg %p72
        %p252 = pneg %p69
        %p253 = pneg %p98
        %p254 = pneg %p95
        %s255 = sand.u32 %s85, 1
        %s256 = scalar_lea.sflag [#allocation6], %s255
        %s257 = sand.u32 %s85, 1
        %s258 = smul.addr %s257, 8
        %s259 = scalar_lea.vmem [#allocation5], %s258
        %p260 = scmp.lt.s32.totalorder %s23, 19
        %s261 = scalar_select %p260, %s23, 19
        %s262 = smul.addr %s261, 8
        %s263 = scalar_lea.vmem %s1, %s262
        %s264 = sld [smem:[#allocation3 + %s23]]
        %s265 = smul.u32 2, %s264
        %v266 = vld [vmem:[%s263] sm:$0x1]
        %v267 = vcvt.f32.s32.to.zero.pseudo %v266
        %v268 = vld [vmem:[%s263 + $0x1] sm:$0x1]
        %v269 = vcvt.f32.s32.to.zero.pseudo %v268
        %v270 = vld [vmem:[%s263 + $0x2] sm:$0x1]
        %v271 = vld [vmem:[%s263 + $0x3] sm:$0x1]
        %v272 = vld [vmem:[%s263 + $0x4] sm:$0x1]
        %v273 = vld [vmem:[%s263 + $0x5] sm:$0x1]
        %v274 = vlaneseq
        %v275 = vshrl.u32 %v274, 7
        %v276 = vadd.s32 %v275, 8
        %v277 = vlaneseq
        %v278 = vshrl.u32 %v277, 7
        %v279 = vsub.s32 0, %v278
        %v280 = vrot.slane %v267, %v279
        %v281 = vsub.s32 %v275, %v280
        %v282 = vsub.s32 %v276, %v280
        %vm283 = vcmp.eq.s32.totalorder %v281, 0
        %vm284 = vcmp.eq.s32.totalorder %v282, 0
        %v285 = vlaneseq
        %v286 = vshrl.u32 %v285, 7
        %v287 = vsub.s32 0, %v286
        %v288 = vrot.slane %v270, %v287
        %v289 = vsel %vm283, %v288, 0.0
        %v290 = vsel %vm284, %v288, 0.0
        %vm291 = vcmp.eq.s32.totalorder %v281, 1
        %vm292 = vcmp.eq.s32.totalorder %v282, 1
        %v293 = vlaneseq
        %v294 = vshrl.u32 %v293, 7
        %v295 = vsub.s32 0, %v294
        %v296 = vrot.slane %v271, %v295
        %v297 = vsel %vm291, %v296, 0.0
        %v298 = vsel %vm292, %v296, 0.0
        %v299 = vadd.f32 %v289, %v297
        %v300 = vadd.f32 %v290, %v298
        %v301 = vlaneseq
        %v302 = vshrl.u32 %v301, 7
        %v303 = vsub.s32 0, %v302
        %v304 = vrot.slane %v269, %v303
        %v305 = vsub.s32 %v275, %v304
        %v306 = vsub.s32 %v276, %v304
        %vm307 = vcmp.eq.s32.totalorder %v305, 0
        %vm308 = vcmp.eq.s32.totalorder %v306, 0
        %v309 = vlaneseq
        %v310 = vshrl.u32 %v309, 7
        %v311 = vsub.s32 0, %v310
        %v312 = vrot.slane %v272, %v311
        %v313 = vsel %vm307, %v312, 0.0
        %v314 = vsel %vm308, %v312, 0.0
        %vm315 = vcmp.eq.s32.totalorder %v305, 1
        %vm316 = vcmp.eq.s32.totalorder %v306, 1
        %v317 = vlaneseq
        %v318 = vshrl.u32 %v317, 7
        %v319 = vsub.s32 0, %v318
        %v320 = vrot.slane %v273, %v319
        %v321 = vsel %vm315, %v320, 0.0
        %v322 = vsel %vm316, %v320, 0.0
        %v323 = vadd.f32 %v313, %v321
        %v324 = vadd.f32 %v314, %v322
        %v325 = vld [vmem:[%s237] sm:$0xff]
        %v326 = vld [vmem:[%s237 + $0x8] sm:$0xff]
        %v327 = vld [vmem:[%s237 + $0x10] sm:$0xff]
        %v328 = vld [vmem:[%s237 + $0x18] sm:$0xff]
        %v329 = vld [vmem:[%s237 + $0x20] sm:$0xff]
        %v330 = vld [vmem:[%s237 + $0x28] sm:$0xff]
        %v331 = vld [vmem:[%s237 + $0x30] sm:$0xff]
        %v332 = vld [vmem:[%s237 + $0x38] sm:$0xff]
        %v333 = vld [vmem:[%s237 + $0x40] sm:$0xff]
        %v334 = vld [vmem:[%s237 + $0x48] sm:$0xff]
        %v335 = vld [vmem:[%s237 + $0x50] sm:$0xff]
        %v336 = vld [vmem:[%s237 + $0x58] sm:$0xff]
        %v337 = vld [vmem:[%s237 + $0x60] sm:$0xff]
        %v338 = vld [vmem:[%s237 + $0x68] sm:$0xff]
        %v339 = vld [vmem:[%s237 + $0x70] sm:$0xff]
        %v340 = vld [vmem:[%s237 + $0x78] sm:$0xff]
        %vm341 = vcmask 130048
        %v343 = vsel %vm341, %v325, 0
        %v346 = vsel %vm341, %v326, 0
        %v349 = vsel %vm341, %v327, 0
        %v352 = vsel %vm341, %v328, 0
        %v355 = vsel %vm341, %v329, 0
        %v358 = vsel %vm341, %v330, 0
        %v361 = vsel %vm341, %v331, 0
        %v364 = vsel %vm341, %v332, 0
        %v367 = vsel %vm341, %v333, 0
        %v370 = vsel %vm341, %v334, 0
        %v373 = vsel %vm341, %v335, 0
        %v376 = vsel %vm341, %v336, 0
        %v379 = vsel %vm341, %v337, 0
        %v382 = vsel %vm341, %v338, 0
        %v385 = vsel %vm341, %v339, 0
        %v388 = vsel %vm341, %v340, 0
        %390 = vmatprep.subr.mxu0 0.0
        %391 = vmatpush1.msra.mxu0 %v299
        %392 = vmatprep.subr.mxu0 0.0
        %393 = vmatpush1.msra.mxu0 %v300
        %394 = vmatprep.subr.mxu0 0.0
        %395 = vmatpush1.msra.mxu0 0.0
        %396 = vmatprep.subr.mxu0 0.0
        %397 = vmatpush1.msra.mxu0 0.0
        %398 = vmatprep.subr.mxu0 0.0
        %399 = vmatpush1.msra.mxu0 0.0
        %400 = vmatprep.subr.mxu0 0.0
        %401 = vmatpush1.msra.mxu0 0.0
        %402 = vmatprep.subr.mxu0 0.0
        %403 = vmatpush1.msra.mxu0 0.0
        %404 = vmatprep.subr.mxu0 0.0
        %405 = vmatpush1.msra.mxu0 0.0
        %406 = vmatprep.subr.mxu0 0.0
        %407 = vmatpush1.msra.mxu0 0.0
        %408 = vmatprep.subr.mxu0 0.0
        %409 = vmatpush1.msra.mxu0 0.0
        %410 = vmatprep.subr.mxu0 0.0
        %411 = vmatpush1.msra.mxu0 0.0
        %412 = vmatprep.subr.mxu0 0.0
        %413 = vmatpush1.msra.mxu0 0.0
        %414 = vmatprep.subr.mxu0 0.0
        %415 = vmatpush1.msra.mxu0 0.0
        %416 = vmatprep.subr.mxu0 0.0
        %417 = vmatpush1.msra.mxu0 0.0
        %418 = vmatprep.subr.mxu0 0.0
        %419 = vmatpush1.msra.mxu0 0.0
        %420 = vmatprep.subr.mxu0 0.0
        %421 = vmatpush1.msra.mxu0 0.0
        %422 = vmatprep.subr.mxu0 0.0
        %423 = vmatpush1.msra.mxu0 0.0
        %424 = vmatprep.subr.mxu0 0.0
        %425 = vmatpush1.msra.mxu0 0.0
        %426 = vmatprep.subr.mxu0 0.0
        %427 = vmatpush1.msra.mxu0 0.0
        %428 = vmatprep.subr.mxu0 0.0
        %429 = vmatpush1.msra.mxu0 0.0
        %430 = vmatprep.subr.mxu0 0.0
        %431 = vmatpush1.msra.mxu0 0.0
        %432 = vmatprep.subr.mxu0 0.0
        %433 = vmatpush1.msra.mxu0 0.0
        %434 = vmatprep.subr.mxu0 0.0
        %435 = vmatpush1.msra.mxu0 0.0
        %436 = vmatprep.subr.mxu0 0.0
        %437 = vmatpush1.msra.mxu0 0.0
        %438 = vmatprep.subr.mxu0 0.0
        %439 = vmatpush1.msra.mxu0 0.0
        %440 = vmatprep.subr.mxu0 0.0
        %441 = vmatpush1.msra.mxu0 0.0
        %442 = vmatprep.subr.mxu0 0.0
        %443 = vmatpush1.msra.mxu0 0.0
        %444 = vmatprep.subr.mxu0 0.0
        %445 = vmatpush1.msra.mxu0 0.0
        %446 = vmatprep.subr.mxu0 0.0
        %447 = vmatpush1.msra.mxu0 0.0
        %448 = vmatprep.subr.mxu0 0.0
        %449 = vmatpush1.msra.mxu0 0.0
        %450 = vmatprep.subr.mxu0 0.0
        %451 = vmatpush1.msra.mxu0 0.0
        %452 = vmatprep.subr.mxu0 0.0
        %453 = vmatpush1.msra.mxu0 0.0
        %454 = vmatprep.mubr.f32.mxu0 0.0
        %455 = vmatmul.mubr.f32.gmra.mrb[0].mxu0 %v343
        %v456 = vpop.f32.mrb[0].mxu0
        %v457 = vadd.f32 0.0, %v456
        %v458 = vpop.f32.mrb[0].mxu0
        %459 = vmatprep.mubr.f32.mxu0 0.0
        %460 = vmatmul.mubr.f32.gmra.mrb[0].mxu0 %v346
        %v461 = vpop.f32.mrb[0].mxu0
        %v462 = vadd.f32 0.0, %v461
        %v463 = vpop.f32.mrb[0].mxu0
        %464 = vmatprep.mubr.f32.mxu0 0.0
        %465 = vmatmul.mubr.f32.gmra.mrb[0].mxu0 %v349
        %v466 = vpop.f32.mrb[0].mxu0
        %v467 = vadd.f32 0.0, %v466
        %v468 = vpop.f32.mrb[0].mxu0
        %469 = vmatprep.mubr.f32.mxu0 0.0
        %470 = vmatmul.mubr.f32.gmra.mrb[0].mxu0 %v352
        %v471 = vpop.f32.mrb[0].mxu0
        %v472 = vadd.f32 0.0, %v471
        %v473 = vpop.f32.mrb[0].mxu0
        %474 = vmatprep.mubr.f32.mxu0 0.0
        %475 = vmatmul.mubr.f32.gmra.mrb[0].mxu0 %v355
        %v476 = vpop.f32.mrb[0].mxu0
        %v477 = vadd.f32 0.0, %v476
        %v478 = vpop.f32.mrb[0].mxu0
        %479 = vmatprep.mubr.f32.mxu0 0.0
        %480 = vmatmul.mubr.f32.gmra.mrb[0].mxu0 %v358
        %v481 = vpop.f32.mrb[0].mxu0
        %v482 = vadd.f32 0.0, %v481
        %v483 = vpop.f32.mrb[0].mxu0
        %484 = vmatprep.mubr.f32.mxu0 0.0
        %485 = vmatmul.mubr.f32.gmra.mrb[0].mxu0 %v361
        %v486 = vpop.f32.mrb[0].mxu0
        %v487 = vadd.f32 0.0, %v486
        %v488 = vpop.f32.mrb[0].mxu0
        %489 = vmatprep.mubr.f32.mxu0 0.0
        %490 = vmatmul.mubr.f32.gmra.mrb[0].mxu0 %v364
        %v491 = vpop.f32.mrb[0].mxu0
        %v492 = vadd.f32 0.0, %v491
        %v493 = vpop.f32.mrb[0].mxu0
        %494 = vmatprep.mubr.f32.mxu0 0.0
        %495 = vmatmul.mubr.f32.gmra.mrb[0].mxu0 %v367
        %v496 = vpop.f32.mrb[0].mxu0
        %v497 = vadd.f32 0.0, %v496
        %v498 = vpop.f32.mrb[0].mxu0
        %499 = vmatprep.mubr.f32.mxu0 0.0
        %500 = vmatmul.mubr.f32.gmra.mrb[0].mxu0 %v370
        %v501 = vpop.f32.mrb[0].mxu0
        %v502 = vadd.f32 0.0, %v501
        %v503 = vpop.f32.mrb[0].mxu0
        %504 = vmatprep.mubr.f32.mxu0 0.0
        %505 = vmatmul.mubr.f32.gmra.mrb[0].mxu0 %v373
        %v506 = vpop.f32.mrb[0].mxu0
        %v507 = vadd.f32 0.0, %v506
        %v508 = vpop.f32.mrb[0].mxu0
        %509 = vmatprep.mubr.f32.mxu0 0.0
        %510 = vmatmul.mubr.f32.gmra.mrb[0].mxu0 %v376
        %v511 = vpop.f32.mrb[0].mxu0
        %v512 = vadd.f32 0.0, %v511
        %v513 = vpop.f32.mrb[0].mxu0
        %514 = vmatprep.mubr.f32.mxu0 0.0
        %515 = vmatmul.mubr.f32.gmra.mrb[0].mxu0 %v379
        %v516 = vpop.f32.mrb[0].mxu0
        %v517 = vadd.f32 0.0, %v516
        %v518 = vpop.f32.mrb[0].mxu0
        %519 = vmatprep.mubr.f32.mxu0 0.0
        %520 = vmatmul.mubr.f32.gmra.mrb[0].mxu0 %v382
        %v521 = vpop.f32.mrb[0].mxu0
        %v522 = vadd.f32 0.0, %v521
        %v523 = vpop.f32.mrb[0].mxu0
        %524 = vmatprep.mubr.f32.mxu0 0.0
        %525 = vmatmul.mubr.f32.gmra.mrb[0].mxu0 %v385
        %v526 = vpop.f32.mrb[0].mxu0
        %v527 = vadd.f32 0.0, %v526
        %v528 = vpop.f32.mrb[0].mxu0
        %529 = vmatprep.mubr.f32.mxu0 0.0
        %530 = vmatmul.mubr.f32.gmra.mrb[0].mxu0 %v388
        %v531 = vpop.f32.mrb[0].mxu0
        %v532 = vadd.f32 0.0, %v531
        %v533 = vpop.f32.mrb[0].mxu0
        %534 = vdwg.mxu0
        %v535 = vmul.f32 %v457, %v323
        %v536 = vmul.f32 %v462, %v324
        %v537 = vmul.f32 %v467, %v323
        %v538 = vmul.f32 %v472, %v324
        %v539 = vmul.f32 %v477, %v323
        %v540 = vmul.f32 %v482, %v324
        %v541 = vmul.f32 %v487, %v323
        %v542 = vmul.f32 %v492, %v324
        %v543 = vmul.f32 %v497, %v323
        %v544 = vmul.f32 %v502, %v324
        %v545 = vmul.f32 %v507, %v323
        %v546 = vmul.f32 %v512, %v324
        %v547 = vmul.f32 %v517, %v323
        %v548 = vmul.f32 %v522, %v324
        %v549 = vmul.f32 %v527, %v323
        %v550 = vmul.f32 %v532, %v324
        %v551 = vadd.f32 %v535, %v536
        %v552 = vrot.slane %v551, 4
        %v553 = vadd.f32 %v551, %v552
        %v554 = vrot.slane %v553, 2
        %v555 = vadd.f32 %v553, %v554
        %v556 = vrot.slane %v555, 1
        %v557 = vadd.f32 %v555, %v556
        %v558 = vadd.f32 %v537, %v538
        %v559 = vrot.slane %v558, 4
        %v560 = vadd.f32 %v558, %v559
        %v561 = vrot.slane %v560, 2
        %v562 = vadd.f32 %v560, %v561
        %v563 = vrot.slane %v562, 1
        %v564 = vadd.f32 %v562, %v563
        %v565 = vadd.f32 %v539, %v540
        %v566 = vrot.slane %v565, 4
        %v567 = vadd.f32 %v565, %v566
        %v568 = vrot.slane %v567, 2
        %v569 = vadd.f32 %v567, %v568
        %v570 = vrot.slane %v569, 1
        %v571 = vadd.f32 %v569, %v570
        %v572 = vadd.f32 %v541, %v542
        %v573 = vrot.slane %v572, 4
        %v574 = vadd.f32 %v572, %v573
        %v575 = vrot.slane %v574, 2
        %v576 = vadd.f32 %v574, %v575
        %v577 = vrot.slane %v576, 1
        %v578 = vadd.f32 %v576, %v577
        %v579 = vadd.f32 %v543, %v544
        %v580 = vrot.slane %v579, 4
        %v581 = vadd.f32 %v579, %v580
        %v582 = vrot.slane %v581, 2
        %v583 = vadd.f32 %v581, %v582
        %v584 = vrot.slane %v583, 1
        %v585 = vadd.f32 %v583, %v584
        %v586 = vadd.f32 %v545, %v546
        %v587 = vrot.slane %v586, 4
        %v588 = vadd.f32 %v586, %v587
        %v589 = vrot.slane %v588, 2
        %v590 = vadd.f32 %v588, %v589
        %v591 = vrot.slane %v590, 1
        %v592 = vadd.f32 %v590, %v591
        %v593 = vadd.f32 %v547, %v548
        %v594 = vrot.slane %v593, 4
        %v595 = vadd.f32 %v593, %v594
        %v596 = vrot.slane %v595, 2
        %v597 = vadd.f32 %v595, %v596
        %v598 = vrot.slane %v597, 1
        %v599 = vadd.f32 %v597, %v598
        %v600 = vadd.f32 %v549, %v550
        %v601 = vrot.slane %v600, 4
        %v602 = vadd.f32 %v600, %v601
        %v603 = vrot.slane %v602, 2
        %v604 = vadd.f32 %v602, %v603
        %v605 = vrot.slane %v604, 1
        %v606 = vadd.f32 %v604, %v605
        %vm615 = vcmask 1041409
        %v616 = vsel %vm615, %v564, %v557
        %vm617 = vcmask 1042434
        %v618 = vsel %vm617, %v571, %v616
        %vm619 = vcmask 1043459
        %v620 = vsel %vm619, %v578, %v618
        %vm621 = vcmask 1044484
        %v622 = vsel %vm621, %v585, %v620
        %vm623 = vcmask 1045509
        %v624 = vsel %vm623, %v592, %v622
        %vm625 = vcmask 1046534
        %v626 = vsel %vm625, %v599, %v624
        %vm627 = vcmask 1047559
        %v628 = vsel %vm627, %v606, %v626
        %630 = vst [vmem:[%s259] sm:$0xff] %v628
        %s631 = sand.u32 %s85, 1
        %s632 = scalar_lea.sflag [#allocation6], %s631
        %s633 = sand.u32 %s85, 1
        %s634 = smul.addr %s633, 8
        %s635 = scalar_lea.vmem [#allocation5], %s634
        // Predicated region
        $region67: #{tpu_custom_call.1} parent=61 // pred_check
          %p636 = pneg %p95
        $region68: #{tpu_custom_call.1} parent=61 // pred_check_branch
          %638 = sbr.rel (%p636) target = $region70
        $region69: #{tpu_custom_call.1} parent=61 // pred_region
          %s640 = ssub.s32 128, 128
          %641 = vsyncadd %s632, %s640
          %s642 = smul.addr %s23, 128
          %s643 = scalar_lea.hbm %s3, %s642
          %s645 = sshll.u32 %s635, 4
          %s646 = int_to_ptr.vmem [resolvable:$true] %s645
          %648 = dma.vmem_to_hbm [thread:$0]  %s646, 128, %s643, %s632
        $region70: #{tpu_custom_call.1} parent=61 // pred_fallthru
          _
      $region62: #{tpu_custom_call.1} parent=5 // pred_fallthru
        _
      %p649 = scmp.le.s32.totalorder 2, %s18
      // Predicated region
      $region71: #{tpu_custom_call.1} parent=5 // pred_check
        %p650 = pneg %p649
      $region72: #{tpu_custom_call.1} parent=5 // pred_check_branch
        %652 = sbr.rel (%p650) target = $region74
      $region73: #{tpu_custom_call.1} parent=5 // pred_region
        %s653 = ssub.s32 %s18, 2
        // Predicated region
        $region75: #{tpu_custom_call.1} parent=73 // pred_check
          %p654 = pneg %p101
        $region76: #{tpu_custom_call.1} parent=73 // pred_check_branch
          %656 = sbr.rel (%p654) target = $region78
        $region77: #{tpu_custom_call.1} parent=73 // pred_region
          %s657 = sand.u32 %s86, 1
          %s658 = scalar_lea.sflag [#allocation6], %s657
          %s659 = sand.u32 %s86, 1
          %s660 = smul.addr %s659, 8
          %s661 = scalar_lea.vmem [#allocation5], %s660
          %662 = dma.done %s658, 128
        $region78: #{tpu_custom_call.1} parent=73 // pred_fallthru
          _
      $region74: #{tpu_custom_call.1} parent=5 // pred_fallthru
        _
    $region6: #{tpu_custom_call.1} parent=1 // loop_footer
      %s22 = sadd.s32 1, %s18
    $region7: #{tpu_custom_call.1} parent=1 // loop_footer_branch
      %17 = sbr.rel target = $region3
    $region8: #{tpu_custom_call.1} parent=1 // loop_exit
      _
    %663 = vsyncpa [#allocation6], 1
    %s664 = scalar_lea.sflag [#allocation6], 1
    %665 = vsyncpa %s664, 1

</llo_original>
